<compile_context>
chip_gen: v5e
topology: v5e:2x2
jax: 0.10.0
libtpu: 0.0.40
codegen_flags: <defaults>
</compile_context>

<pallas_src>
import jax
import jax.numpy as jnp
from jax import lax
from jax.experimental import pallas as pl
from jax.experimental.pallas import tpu as pltpu


def _round_up(x, m):
    return ((x + m - 1) // m) * m


def sl_network_kernel(x_ref, w1_ref, b1_ref, w2_ref, b2_ref, o_ref):
    """One batch tile.

    x_ref  : (TB, S)    batch tile, features on the lane axis
    w1_ref : (H, S)     fc1.weight (PyTorch layout)
    b1_ref : (H, 1)     fc1.bias as a column
    w2_ref : (H, 1)     fc2.weight as a column
    b2_ref : (1, 1)     fc2.bias, scalar in SMEM
    o_ref  : (1, 1, TB) lane-dense output row for this tile
    """
    # fc1 on the MXU in transposed form: (H, S) . (TB, S)^T -> (H, TB).
    h_t = lax.dot_general(
        w1_ref[...],
        x_ref[...],
        dimension_numbers=(((1,), (1,)), ((), ())),
        preferred_element_type=jnp.float32,
    )
    h_t = h_t + b1_ref[...]                        # (H, 1) broadcast over lanes
    h_t = jnp.where(h_t > 0.0, h_t, 0.01 * h_t)    # LeakyReLU, slope 0.01

    # Dropout(p=0.2) is identity at inference time.
    # TODO(synk): training-mode stochastic dropout (pltpu.prng_*) not implemented.

    # fc2 on the VPU/XLU: elementwise mul + sublane reduction -> (1, TB).
    out = jnp.sum(h_t * w2_ref[...], axis=0, keepdims=True)
    out = out + b2_ref[0, 0]                       # scalar bias from SMEM
    o_ref[...] = out.reshape(1, 1, -1).astype(o_ref.dtype)


def sl_network_forward(x, w1, b1, w2, b2, *, tile_batch=512):
    """SL_Network forward.

    x : (B, S) float32
    w1: (H, S) float32   (fc1.weight, PyTorch layout)
    b1: (H, 1) float32
    w2: (H, 1) float32   (fc2.weight, stored as a column)
    b2: (1, 1) float32
    returns (B, 1) float32
    """
    B, S = x.shape
    H, S2 = w1.shape
    assert S2 == S and b1.shape == (H, 1) and w2.shape == (H, 1) and b2.shape == (1, 1)

    # Batch tile: multiple of 8 (f32 sublane), capped by the (padded) batch.
    TB = min(_round_up(tile_batch, 8), _round_up(B, 8))
    B_pad = _round_up(B, TB)
    num_tiles = B_pad // TB
    if B_pad != B:
        x = jnp.pad(x, ((0, B_pad - B), (0, 0)))

    out = pl.pallas_call(
        sl_network_kernel,
        out_shape=jax.ShapeDtypeStruct((num_tiles, 1, TB), jnp.float32),
        grid=(num_tiles,),
        in_specs=[
            pl.BlockSpec((TB, S), lambda i: (i, 0)),   # batch-tiled, pipelined
            pl.BlockSpec((H, S), lambda i: (0, 0)),    # resident weights
            pl.BlockSpec((H, 1), lambda i: (0, 0)),
            pl.BlockSpec((H, 1), lambda i: (0, 0)),
            pl.BlockSpec(memory_space=pltpu.MemorySpace.SMEM),  # b2 scalar
        ],
        out_specs=pl.BlockSpec((1, 1, TB), lambda i: (i, 0, 0)),
        compiler_params=pltpu.CompilerParams(
            dimension_semantics=("parallel",),
        ),
    )(x, w1, b1, w2, b2)

    return out.reshape(B_pad)[:B].reshape(B, 1)


def sl_network_reference(x, w1, b1, w2, b2):
    """Pure-JAX reference matching the PyTorch forward."""
    h = x @ w1.T + b1.reshape(1, -1)
    h = jnp.where(h > 0, h, 0.01 * h)
    return h @ w2 + b2


def init_params(key, state_num, hidden_units_num):
    """Uniform(-1/sqrt(fan_in), 1/sqrt(fan_in)) init, mimicking nn.Linear."""
    k1, k2, k3, k4 = jax.random.split(key, 4)
    bound1 = 1.0 / jnp.sqrt(state_num)
    bound2 = 1.0 / jnp.sqrt(hidden_units_num)
    w1 = jax.random.uniform(k1, (hidden_units_num, state_num), jnp.float32,
                            minval=-bound1, maxval=bound1)
    b1 = jax.random.uniform(k2, (hidden_units_num, 1), jnp.float32,
                            minval=-bound1, maxval=bound1)
    w2 = jax.random.uniform(k3, (hidden_units_num, 1), jnp.float32,
                            minval=-bound2, maxval=bound2)
    b2 = jax.random.uniform(k4, (1, 1), jnp.float32,
                            minval=-bound2, maxval=bound2)
    return w1, b1, w2, b2


if __name__ == "__main__":
    # Kuhn poker: state_num=7, hidden=32.
    state_num = 7
    hidden_units_num = 32

    key = jax.random.PRNGKey(0)
    kx, kx2, kp = jax.random.split(key, 3)
    w1, b1, w2, b2 = init_params(kp, state_num, hidden_units_num)

    # Multi-tile path: batch=40 with tile_batch=16 -> 3 grid steps, last padded.
    x = jax.random.normal(kx, (40, state_num), jnp.float32)
    out = sl_network_forward(x, w1, b1, w2, b2, tile_batch=16)
    out = jax.block_until_ready(out)
    ref = sl_network_reference(x, w1, b1, w2, b2)
    assert out.shape == (40, 1)
    assert jnp.allclose(out, ref, atol=1e-5, rtol=1e-5)

    # Single-tile / default path: batch=8.
    x2 = jax.random.normal(kx2, (8, state_num), jnp.float32)
    out2 = jax.block_until_ready(sl_network_forward(x2, w1, b1, w2, b2))
    ref2 = sl_network_reference(x2, w1, b1, w2, b2)
    assert out2.shape == (8, 1)
    assert jnp.allclose(out2, ref2, atol=1e-5, rtol=1e-5)

    print("KERNEL_OK")
</pallas_src>

<mosaic_0001>
module attributes {stable_mosaic.version = 11 : i64} {
  func.func @sl_network_kernel(%arg0: i32, %arg1: memref<16x7xf32, #tpu.memory_space<vmem>>, %arg2: memref<32x7xf32, #tpu.memory_space<vmem>>, %arg3: memref<32x1xf32, #tpu.memory_space<vmem>>, %arg4: memref<32x1xf32, #tpu.memory_space<vmem>>, %arg5: memref<1x1xf32, #tpu.memory_space<smem>>, %arg6: memref<1x1x16xf32, #tpu.memory_space<vmem>>) attributes {dimension_semantics = [#tpu.dimension_semantics<parallel>], iteration_bounds = array<i64: 3>, scalar_prefetch = 0 : i64, scratch_operands = 0 : i64, tpu.core_type = #tpu.core_type<tc>, window_params = [{transform_indices = @transform_0, window_bounds = array<i64: 16, 7>}, {pipeline_mode = #tpu.pipeline_mode<synchronous>, transform_indices = @transform_1, window_bounds = array<i64: 32, 7>}, {pipeline_mode = #tpu.pipeline_mode<synchronous>, transform_indices = @transform_2, window_bounds = array<i64: 32, 1>}, {pipeline_mode = #tpu.pipeline_mode<synchronous>, transform_indices = @transform_3, window_bounds = array<i64: 32, 1>}, {transform_indices = @transform_4, window_bounds = array<i64: 1, 1>}, {transform_indices = @transform_5, window_bounds = array<i64: 1, 1, 16>}]} {
    %c0 = arith.constant 0 : index
    %c0_0 = arith.constant 0 : index
    %0 = vector.load %arg2[%c0, %c0_0] : memref<32x7xf32, #tpu.memory_space<vmem>>, vector<32x7xf32>
    %c0_1 = arith.constant 0 : index
    %c0_2 = arith.constant 0 : index
    %1 = vector.load %arg1[%c0_1, %c0_2] : memref<16x7xf32, #tpu.memory_space<vmem>>, vector<16x7xf32>
    %cst = arith.constant dense<0.000000e+00> : vector<32x16xf32>
    %2 = tpu.matmul %0, %1, %cst {dimension_numbers = #tpu.dot_dimension_numbers<[1], [1], [0], [0], [0, 0, 1, 0], [], []>} : vector<32x7xf32>, vector<16x7xf32>, vector<32x16xf32> -> vector<32x16xf32>
    %c0_3 = arith.constant 0 : index
    %c0_4 = arith.constant 0 : index
    %3 = vector.load %arg3[%c0_3, %c0_4] : memref<32x1xf32, #tpu.memory_space<vmem>>, vector<32x1xf32>
    %4 = vector.broadcast %3 : vector<32x1xf32> to vector<32x16xf32>
    %5 = arith.addf %2, %4 : vector<32x16xf32>
    %cst_5 = arith.constant 0.000000e+00 : f32
    %6 = vector.broadcast %cst_5 : f32 to vector<32x16xf32>
    %7 = arith.cmpf ogt, %5, %6 : vector<32x16xf32>
    %cst_6 = arith.constant 0.00999999977 : f32
    %8 = vector.broadcast %cst_6 : f32 to vector<32x16xf32>
    %9 = arith.mulf %8, %5 : vector<32x16xf32>
    %10 = arith.select %7, %5, %9 : vector<32x16xi1>, vector<32x16xf32>
    %c0_7 = arith.constant 0 : index
    %c0_8 = arith.constant 0 : index
    %11 = vector.load %arg4[%c0_7, %c0_8] : memref<32x1xf32, #tpu.memory_space<vmem>>, vector<32x1xf32>
    %12 = vector.broadcast %11 : vector<32x1xf32> to vector<32x16xf32>
    %13 = arith.mulf %10, %12 : vector<32x16xf32>
    %cst_9 = arith.constant dense<0.000000e+00> : vector<16xf32>
    %14 = vector.multi_reduction <add>, %13, %cst_9 [0] : vector<32x16xf32> to vector<16xf32>
    %15 = vector.shape_cast %14 : vector<16xf32> to vector<1x16xf32>
    %c0_10 = arith.constant 0 : index
    %c0_11 = arith.constant 0 : index
    %16 = memref.load %arg5[%c0_10, %c0_11] : memref<1x1xf32, #tpu.memory_space<smem>>
    %17 = vector.broadcast %16 : f32 to vector<1x16xf32>
    %18 = arith.addf %15, %17 : vector<1x16xf32>
    %19 = vector.shape_cast %18 : vector<1x16xf32> to vector<1x1x16xf32>
    %c0_12 = arith.constant 0 : index
    %c0_13 = arith.constant 0 : index
    %c0_14 = arith.constant 0 : index
    %20 = vector.load %arg6[%c0_12, %c0_13, %c0_14] : memref<1x1x16xf32, #tpu.memory_space<vmem>>, vector<1x1x16xf32>
    tpu.vector_store %arg6[%c0_12, %c0_13, %c0_14], %19 {strides = array<i32>} : memref<1x1x16xf32, #tpu.memory_space<vmem>>, vector<1x1x16xf32>,
    return
  }
  func.func @transform_0(%arg0: i32) -> (i32, i32) {
    %c0_i32 = arith.constant 0 : i32
    %c0_i32_0 = arith.constant 0 : i32
    return %arg0, %c0_i32 : i32, i32
  }
  func.func @transform_1(%arg0: i32) -> (i32, i32) {
    %c0_i32 = arith.constant 0 : i32
    %c0_i32_0 = arith.constant 0 : i32
    %c0_i32_1 = arith.constant 0 : i32
    return %c0_i32, %c0_i32_0 : i32, i32
  }
  func.func @transform_2(%arg0: i32) -> (i32, i32) {
    %c0_i32 = arith.constant 0 : i32
    %c0_i32_0 = arith.constant 0 : i32
    %c0_i32_1 = arith.constant 0 : i32
    return %c0_i32, %c0_i32_0 : i32, i32
  }
  func.func @transform_3(%arg0: i32) -> (i32, i32) {
    %c0_i32 = arith.constant 0 : i32
    %c0_i32_0 = arith.constant 0 : i32
    %c0_i32_1 = arith.constant 0 : i32
    return %c0_i32, %c0_i32_0 : i32, i32
  }
  func.func @transform_4(%arg0: i32) -> (i32, i32) {
    %c0_i32 = arith.constant 0 : i32
    %c0_i32_0 = arith.constant 0 : i32
    %c0_i32_1 = arith.constant 0 : i32
    return %c0_i32, %c0_i32_0 : i32, i32
  }
  func.func @transform_5(%arg0: i32) -> (i32, i32, i32) {
    %c0_i32 = arith.constant 0 : i32
    %c0_i32_0 = arith.constant 0 : i32
    %c0_i32_1 = arith.constant 0 : i32
    return %arg0, %c0_i32, %c0_i32_0 : i32, i32, i32
  }
}

</mosaic_0001>

<llo_original>
// kernel: tpu_custom_call.1
$region0: #{tpu_custom_call.1}
  #allocation0 [shape = 'u32[]', space=smem, size = 0x4, offset = 0x4, fixed_abs, tag = 'smem constant byte address 0x4 - core index']
  #allocation1 [shape = 'u32[72,128]{1,0:T(1,128)}', space=vmem, size = 0x9000, scoped, tag = 'internal scratch']
  #allocation2 [shape = 'f32[1,1]{1,0:T(1,128)S(6)}', space=smem, size = 0x200, scoped, tag = 'scoped memory for tpu_custom_call.1']
  %s0 = inlined_call_operand.vmem [shape: f32[48,7], index: 0, kind: input, shape index: {}]
  %s1 = inlined_call_operand.vmem [shape: f32[32,7], index: 1, kind: input, shape index: {}]
  %s2 = inlined_call_operand.vmem [shape: f32[32,1], index: 2, kind: input, shape index: {}]
  %s3 = inlined_call_operand.vmem [shape: f32[32,1], index: 3, kind: input, shape index: {}]
  %s4 = inlined_call_operand.<no memory space> [shape: f32[1,1], index: 4, kind: input, shape index: {}]
  %s5 = inlined_call_operand.hbm [shape: f32[3,1,16], index: 5, kind: output, shape index: {}]
  %s6 = sld [smem:[#allocation0]]
  $region53: #{tpu_custom_call.1} parent=0
    _
  %s8 = ssub.s32 1, %s6
  %s9 = scalar_select 0, %s8, %s6
  %10 = sst [smem:[#allocation2]] %s4
  $region1: #{tpu_custom_call.1} parent=0
    #allocation3 [shape = 'u8[1024]{0}', space=vmem, size = 0x400, scoped, tag = 'output window, operand 0']
    #allocation4 [shape = 's32[2]{0}', space=sflag, size = 0x8, scoped, tag = 'scoped memory for tpu_custom_call.1']
    %11 = vsyncpa [#allocation4], 0
    %s12 = scalar_lea.sflag [#allocation4], 1
    %13 = vsyncpa %s12, 0
    loop: start=0, step=1, limit=5
    $region2: #{tpu_custom_call.1} parent=1 // loop_pre_header
      _
    $region3: #{tpu_custom_call.1} parent=1 // loop_header
      %s15 = sphi 0, %s19
      %p16 = scmp.ge.s32.totalorder %s15, 5
      %s25 = sphi 0, %s27
      %s28 = sphi 0, %s25
      %s29 = sphi 0, %s28
      %s45 = sphi 0, %s29
      %s49 = sphi 0, %s49
      %s51 = sphi 0, %s49
      %s52 = sphi 0, %s51
      %s66 = sphi 0, %s52
      %s70 = sphi 0, %s70
      %s72 = sphi 0, %s70
      %s73 = sphi 0, %s72
      %s87 = sphi 0, %s73
      %s91 = sphi 0, %s91
      %s93 = sphi 0, %s91
      %s94 = sphi 0, %s93
      %s108 = sphi 0, %s94
      %s112 = sphi 0, %s112
      %s114 = sphi 0, %s112
      %s115 = sphi 0, %s114
      %s129 = sphi 0, %s115
      %s135 = sphi 0, %s137
      %s138 = sphi 0, %s135
      %s139 = sphi 0, %s138
      %s155 = sphi 0, %s139
    $region4: #{tpu_custom_call.1} parent=1 // loop_header_branch
      %18 = sbr.rel (%p16) target = $region8
    $region5: #{tpu_custom_call.1} parent=1 // loop_body
      %s20 = ssub.s32 %s15, 1
      %s21 = ssub.s32 %s15, 2
      %s22 = sadd.s32 %s15, 1
      %s23 = ssub.s32 %s15, %s22
      %p24 = scmp.eq.s32.totalorder %s23, 0
      %s26 = sadd.s32 %s25, 1
      %s27 = scalar_select %p24, %s25, %s26
      %p30 = pneg %p24
      %p31 = scmp.eq.s32.totalorder %s15, 2
      %p32 = por %p30, %p31
      %p33 = scmp.ne.s32.totalorder %s25, %s28
      %p34 = scmp.eq.s32.totalorder %s15, 0
      %p35 = por %p33, %p34
      %p36 = scmp.ne.s32.totalorder %s25, %s28
      %p37 = scmp.eq.s32.totalorder %s20, 2
      %p38 = por %p36, %p37
      %p39 = scmp.ne.s32.totalorder %s28, %s29
      %p40 = scmp.eq.s32.totalorder %s20, 0
      %p41 = por %p39, %p40
      %p42 = scmp.ne.s32.totalorder %s28, %s29
      %p43 = scmp.eq.s32.totalorder %s21, 2
      %p44 = por %p42, %p43
      %p46 = scmp.ne.s32.totalorder %s29, %s45
      %p47 = scmp.eq.s32.totalorder %s21, 0
      %p48 = por %p46, %p47
      %s50 = sadd.s32 %s49, 1
      %p53 = scmp.eq.s32.totalorder %s15, 2
      %p54 = scmp.ne.s32.totalorder %s49, %s51
      %p55 = scmp.eq.s32.totalorder %s15, 0
      %p56 = por %p54, %p55
      %p57 = scmp.ne.s32.totalorder %s49, %s51
      %p58 = scmp.eq.s32.totalorder %s20, 2
      %p59 = por %p57, %p58
      %p60 = scmp.ne.s32.totalorder %s51, %s52
      %p61 = scmp.eq.s32.totalorder %s20, 0
      %p62 = por %p60, %p61
      %p63 = scmp.ne.s32.totalorder %s51, %s52
      %p64 = scmp.eq.s32.totalorder %s21, 2
      %p65 = por %p63, %p64
      %p67 = scmp.ne.s32.totalorder %s52, %s66
      %p68 = scmp.eq.s32.totalorder %s21, 0
      %p69 = por %p67, %p68
      %s71 = sadd.s32 %s70, 1
      %p74 = scmp.eq.s32.totalorder %s15, 2
      %p75 = scmp.ne.s32.totalorder %s70, %s72
      %p76 = scmp.eq.s32.totalorder %s15, 0
      %p77 = por %p75, %p76
      %p78 = scmp.ne.s32.totalorder %s70, %s72
      %p79 = scmp.eq.s32.totalorder %s20, 2
      %p80 = por %p78, %p79
      %p81 = scmp.ne.s32.totalorder %s72, %s73
      %p82 = scmp.eq.s32.totalorder %s20, 0
      %p83 = por %p81, %p82
      %p84 = scmp.ne.s32.totalorder %s72, %s73
      %p85 = scmp.eq.s32.totalorder %s21, 2
      %p86 = por %p84, %p85
      %p88 = scmp.ne.s32.totalorder %s73, %s87
      %p89 = scmp.eq.s32.totalorder %s21, 0
      %p90 = por %p88, %p89
      %s92 = sadd.s32 %s91, 1
      %p95 = scmp.eq.s32.totalorder %s15, 2
      %p96 = scmp.ne.s32.totalorder %s91, %s93
      %p97 = scmp.eq.s32.totalorder %s15, 0
      %p98 = por %p96, %p97
      %p99 = scmp.ne.s32.totalorder %s91, %s93
      %p100 = scmp.eq.s32.totalorder %s20, 2
      %p101 = por %p99, %p100
      %p102 = scmp.ne.s32.totalorder %s93, %s94
      %p103 = scmp.eq.s32.totalorder %s20, 0
      %p104 = por %p102, %p103
      %p105 = scmp.ne.s32.totalorder %s93, %s94
      %p106 = scmp.eq.s32.totalorder %s21, 2
      %p107 = por %p105, %p106
      %p109 = scmp.ne.s32.totalorder %s94, %s108
      %p110 = scmp.eq.s32.totalorder %s21, 0
      %p111 = por %p109, %p110
      %s113 = sadd.s32 %s112, 1
      %p116 = scmp.eq.s32.totalorder %s15, 2
      %p117 = scmp.ne.s32.totalorder %s112, %s114
      %p118 = scmp.eq.s32.totalorder %s15, 0
      %p119 = por %p117, %p118
      %p120 = scmp.ne.s32.totalorder %s112, %s114
      %p121 = scmp.eq.s32.totalorder %s20, 2
      %p122 = por %p120, %p121
      %p123 = scmp.ne.s32.totalorder %s114, %s115
      %p124 = scmp.eq.s32.totalorder %s20, 0
      %p125 = por %p123, %p124
      %p126 = scmp.ne.s32.totalorder %s114, %s115
      %p127 = scmp.eq.s32.totalorder %s21, 2
      %p128 = por %p126, %p127
      %p130 = scmp.ne.s32.totalorder %s115, %s129
      %p131 = scmp.eq.s32.totalorder %s21, 0
      %p132 = por %p130, %p131
      %s133 = ssub.s32 %s15, %s22
      %p134 = scmp.eq.s32.totalorder %s133, 0
      %s136 = sadd.s32 %s135, 1
      %s137 = scalar_select %p134, %s135, %s136
      %p140 = pneg %p134
      %p141 = scmp.eq.s32.totalorder %s15, 2
      %p142 = por %p140, %p141
      %p143 = scmp.ne.s32.totalorder %s135, %s138
      %p144 = scmp.eq.s32.totalorder %s15, 0
      %p145 = por %p143, %p144
      %p146 = scmp.ne.s32.totalorder %s135, %s138
      %p147 = scmp.eq.s32.totalorder %s20, 2
      %p148 = por %p146, %p147
      %p149 = scmp.ne.s32.totalorder %s138, %s139
      %p150 = scmp.eq.s32.totalorder %s20, 0
      %p151 = por %p149, %p150
      %p152 = scmp.ne.s32.totalorder %s138, %s139
      %p153 = scmp.eq.s32.totalorder %s21, 2
      %p154 = por %p152, %p153
      %p156 = scmp.ne.s32.totalorder %s139, %s155
      %p157 = scmp.eq.s32.totalorder %s21, 0
      %p158 = por %p156, %p157
      %p159 = scmp.le.s32.totalorder 1, %s15
      %p160 = scmp.lt.s32.totalorder %s15, 4
      %p161 = pnand %p159, %p160
      %p162 = pneg %p161
      // Predicated region
      $region9: #{tpu_custom_call.1} parent=5 // pred_check
        _
      $region10: #{tpu_custom_call.1} parent=5 // pred_check_branch
        %164 = sbr.rel (%p161) target = $region12
      $region11: #{tpu_custom_call.1} parent=5 // pred_region
        %s165 = ssub.s32 %s15, 1
        // Predicated region
        $region13: #{tpu_custom_call.1} parent=11 // pred_check
          %p166 = pneg %p62
        $region14: #{tpu_custom_call.1} parent=11 // pred_check_branch
          %168 = sbr.rel (%p166) target = $region16
        $region15: #{tpu_custom_call.1} parent=11 // pred_region
          _
        $region16: #{tpu_custom_call.1} parent=11 // pred_fallthru
          _
        // Predicated region
        $region17: #{tpu_custom_call.1} parent=11 // pred_check
          %p169 = pneg %p83
        $region18: #{tpu_custom_call.1} parent=11 // pred_check_branch
          %171 = sbr.rel (%p169) target = $region20
        $region19: #{tpu_custom_call.1} parent=11 // pred_region
          _
        $region20: #{tpu_custom_call.1} parent=11 // pred_fallthru
          _
        // Predicated region
        $region21: #{tpu_custom_call.1} parent=11 // pred_check
          %p172 = pneg %p104
        $region22: #{tpu_custom_call.1} parent=11 // pred_check_branch
          %174 = sbr.rel (%p172) target = $region24
        $region23: #{tpu_custom_call.1} parent=11 // pred_region
          _
        $region24: #{tpu_custom_call.1} parent=11 // pred_fallthru
          _
        // Predicated region
        $region25: #{tpu_custom_call.1} parent=11 // pred_check
          %p175 = pneg %p125
        $region26: #{tpu_custom_call.1} parent=11 // pred_check_branch
          %177 = sbr.rel (%p175) target = $region28
        $region27: #{tpu_custom_call.1} parent=11 // pred_region
          _
        $region28: #{tpu_custom_call.1} parent=11 // pred_fallthru
          _
      $region12: #{tpu_custom_call.1} parent=5 // pred_fallthru
        _
      %p178 = scmp.lt.s32.totalorder %s15, 3
      // Predicated region
      $region29: #{tpu_custom_call.1} parent=5 // pred_check
        %p179 = pneg %p178
      $region30: #{tpu_custom_call.1} parent=5 // pred_check_branch
        %181 = sbr.rel (%p179) target = $region32
      $region31: #{tpu_custom_call.1} parent=5 // pred_region
        // Predicated region
        $region33: #{tpu_custom_call.1} parent=31 // pred_check
          %p182 = pneg %p35
        $region34: #{tpu_custom_call.1} parent=31 // pred_check_branch
          %184 = sbr.rel (%p182) target = $region36
        $region35: #{tpu_custom_call.1} parent=31 // pred_region
          %s185 = smul.u32 2, %s15
          %p186 = scmp.lt.s32.totalorder %s185, 5
          %s187 = scalar_select %p186, %s185, 5
          %s188 = smul.addr %s187, 8
          %s189 = scalar_lea.vmem %s0, %s188
          %s190 = smul.u32 2, %s15
        $region36: #{tpu_custom_call.1} parent=31 // pred_fallthru
          _
      $region32: #{tpu_custom_call.1} parent=5 // pred_fallthru
        _
      %p191 = scmp.le.s32.totalorder 1, %s15
      %p192 = scmp.lt.s32.totalorder %s15, 4
      %p193 = pnand %p191, %p192
      %p194 = pneg %p193
      // Predicated region
      $region37: #{tpu_custom_call.1} parent=5 // pred_check
        _
      $region38: #{tpu_custom_call.1} parent=5 // pred_check_branch
        %196 = sbr.rel (%p193) target = $region40
      $region39: #{tpu_custom_call.1} parent=5 // pred_region
        %s197 = ssub.s32 %s15, 1
        %s198 = smul.u32 2, %s20
        %p199 = scmp.lt.s32.totalorder %s198, 5
        %s200 = scalar_select %p199, %s198, 5
        %s201 = smul.addr %s200, 8
        %s202 = scalar_lea.vmem %s0, %s201
        %p203 = pneg %p41
        %p204 = pneg %p38
        %p205 = pneg %p62
        %p206 = pneg %p59
        %p207 = pneg %p83
        %p208 = pneg %p80
        %p209 = pneg %p104
        %p210 = pneg %p101
        %p211 = pneg %p125
        %p212 = pneg %p122
        %p213 = pneg %p151
        %p214 = pneg %p148
        %s215 = sand.u32 %s138, 1
        %s216 = scalar_lea.sflag [#allocation4], %s215
        %s217 = sand.u32 %s138, 1
        %s218 = scalar_lea.vmem [#allocation3], %s217
        %s219 = smul.u32 2, %s20
        %p220 = scmp.lt.s32.totalorder %s219, 5
        %s221 = scalar_select %p220, %s219, 5
        %s222 = smul.addr %s221, 8
        %s223 = scalar_lea.vmem %s0, %s222
        %s224 = smul.u32 2, %s20
        %v225 = vld [vmem:[%s1] sm:$0xff]
        %v226 = vld [vmem:[%s1 + $0x8] sm:$0xff]
        %v227 = vld [vmem:[%s1 + $0x10] sm:$0xff]
        %v228 = vld [vmem:[%s1 + $0x18] sm:$0xff]
        %v229 = vld [vmem:[%s223] sm:$0xff]
        %v230 = vld [vmem:[%s223 + $0x8] sm:$0xff]
        %v231 = vld [vmem:[%s2] sm:$0xff]
        %v232 = vld [vmem:[%s2 + $0x8] sm:$0xff]
        %v233 = vld [vmem:[%s2 + $0x10] sm:$0xff]
        %v234 = vld [vmem:[%s2 + $0x18] sm:$0xff]
        %236 = vset.pattern.permute.xlu0 0
        %237 = vperm.xlu0 %236, %v231
        %v238 = vpop.permute.xlu0 %237
        %241 = vset.pattern.permute.xlu0 0
        %242 = vperm.xlu0 %241, %v232
        %v243 = vpop.permute.xlu0 %242
        %246 = vset.pattern.permute.xlu0 0
        %247 = vperm.xlu0 %246, %v233
        %v248 = vpop.permute.xlu0 %247
        %251 = vset.pattern.permute.xlu0 0
        %252 = vperm.xlu0 %251, %v234
        %v253 = vpop.permute.xlu0 %252
        %vm255 = vcmask 56320
        %v257 = vsel %vm255, %v225, 0
        %v260 = vsel %vm255, %v226, 0
        %v263 = vsel %vm255, %v227, 0
        %v266 = vsel %vm255, %v228, 0
        %v269 = vsel %vm255, %v229, 0
        %v272 = vsel %vm255, %v230, 0
        %274 = vmatpush.xpose.msra.mxu0 0.0
        %275 = vmatpush.xpose.msra.mxu0 0.0
        %276 = vmatpush.xpose.msra.mxu0 0.0
        %277 = vmatpush.xpose.msra.mxu0 0.0
        %278 = vmatpush.xpose.msra.mxu0 0.0
        %279 = vmatpush.xpose.msra.mxu0 0.0
        %280 = vmatpush.xpose.msra.mxu0 0.0
        %281 = vmatpush.xpose.msra.mxu0 0.0
        %282 = vmatpush.xpose.msra.mxu0 0.0
        %283 = vmatpush.xpose.msra.mxu0 0.0
        %284 = vmatpush.xpose.msra.mxu0 0.0
        %285 = vmatpush.xpose.msra.mxu0 0.0
        %286 = vmatpush.xpose.msra.mxu0 0.0
        %287 = vmatpush.xpose.msra.mxu0 0.0
        %288 = vmatpush.xpose.msra.mxu0 %v272
        %289 = vmatpush.xpose.msra.mxu0 %v269
        %290 = vmatmul.f32.gmra.mxu0 %v257
        %v291 = vpop.f32.mrf.mxu0
        %v292 = vadd.f32 %v238, %v291
        %293 = vmatmul.f32.gmra.mxu0 %v260
        %v294 = vpop.f32.mrf.mxu0
        %v295 = vadd.f32 %v243, %v294
        %296 = vmatmul.f32.gmra.mxu0 %v263
        %v297 = vpop.f32.mrf.mxu0
        %v298 = vadd.f32 %v248, %v297
        %299 = vmatmul.f32.gmra.mxu0 %v266
        %v300 = vpop.f32.mrf.mxu0
        %v301 = vadd.f32 %v253, %v300
        %302 = vdwg.mxu0
        %vm303 = vcmp.gt.f32.partialorder %v292, 0.0
        %vm304 = vcmp.gt.f32.partialorder %v295, 0.0
        %vm305 = vcmp.gt.f32.partialorder %v298, 0.0
        %vm306 = vcmp.gt.f32.partialorder %v301, 0.0
        %v307 = vmul.f32 %v292, 0.01
        %v308 = vmul.f32 %v295, 0.01
        %v309 = vmul.f32 %v298, 0.01
        %v310 = vmul.f32 %v301, 0.01
        %v311 = vsel %vm303, %v292, %v307
        %v312 = vsel %vm304, %v295, %v308
        %v313 = vsel %vm305, %v298, %v309
        %v314 = vsel %vm306, %v301, %v310
        %v315 = vld [vmem:[%s3] sm:$0xff]
        %v316 = vld [vmem:[%s3 + $0x8] sm:$0xff]
        %v317 = vld [vmem:[%s3 + $0x10] sm:$0xff]
        %v318 = vld [vmem:[%s3 + $0x18] sm:$0xff]
        %320 = vset.pattern.permute.xlu0 0
        %321 = vperm.xlu0 %320, %v315
        %v322 = vpop.permute.xlu0 %321
        %325 = vset.pattern.permute.xlu0 0
        %326 = vperm.xlu0 %325, %v316
        %v327 = vpop.permute.xlu0 %326
        %330 = vset.pattern.permute.xlu0 0
        %331 = vperm.xlu0 %330, %v317
        %v332 = vpop.permute.xlu0 %331
        %335 = vset.pattern.permute.xlu0 0
        %336 = vperm.xlu0 %335, %v318
        %v337 = vpop.permute.xlu0 %336
        %v339 = vmul.f32 %v311, %v322
        %v340 = vmul.f32 %v312, %v327
        %v341 = vmul.f32 %v313, %v332
        %v342 = vmul.f32 %v314, %v337
        %vm343 = vcmask 130048
        %v344 = vsel %vm343, %v339, 0.0
        %v345 = vsel %vm343, %v340, 0.0
        %v346 = vadd.f32 %v344, %v345
        %v347 = vsel %vm343, %v341, 0.0
        %v348 = vadd.f32 %v346, %v347
        %v349 = vsel %vm343, %v342, 0.0
        %v350 = vadd.f32 %v348, %v349
        %v351 = vrot.slane %v350, 4
        %v352 = vadd.f32 %v350, %v351
        %v353 = vrot.slane %v352, 2
        %v354 = vadd.f32 %v352, %v353
        %v355 = vrot.slane %v354, 1
        %v356 = vadd.f32 %v354, %v355
        %s357 = sld [smem:[#allocation2]]
        %v358 = vstv %s357
        %v359 = vadd.f32 %v356, %v358
        %vm360 = vcmask 122880
        %361 = vst.msk [vmem:[%s218] sm:$0x1] %vm360, %v359
        %s362 = sand.u32 %s138, 1
        %s363 = scalar_lea.sflag [#allocation4], %s362
        %s364 = sand.u32 %s138, 1
        %s365 = scalar_lea.vmem [#allocation3], %s364
        // Predicated region
        $region41: #{tpu_custom_call.1} parent=39 // pred_check
          %p366 = pneg %p148
        $region42: #{tpu_custom_call.1} parent=39 // pred_check_branch
          %368 = sbr.rel (%p366) target = $region44
        $region43: #{tpu_custom_call.1} parent=39 // pred_region
          %370 = vsyncadd %s363, 0
          %s371 = scalar_lea.hbm %s5, %s20
          %s373 = sshll.u32 %s365, 4
          %s374 = int_to_ptr.vmem [resolvable:$true] %s373
          %s375 = sshll.u32 %s371, 4
          %s376 = int_to_ptr.hbm [resolvable:$true] %s375
          %378 = dma.vmem_to_hbm [thread:$0]  %s374, 16, %s376, %s363
        $region44: #{tpu_custom_call.1} parent=39 // pred_fallthru
          _
      $region40: #{tpu_custom_call.1} parent=5 // pred_fallthru
        _
      %p379 = scmp.le.s32.totalorder 2, %s15
      // Predicated region
      $region45: #{tpu_custom_call.1} parent=5 // pred_check
        %p380 = pneg %p379
      $region46: #{tpu_custom_call.1} parent=5 // pred_check_branch
        %382 = sbr.rel (%p380) target = $region48
      $region47: #{tpu_custom_call.1} parent=5 // pred_region
        %s383 = ssub.s32 %s15, 2
        // Predicated region
        $region49: #{tpu_custom_call.1} parent=47 // pred_check
          %p384 = pneg %p154
        $region50: #{tpu_custom_call.1} parent=47 // pred_check_branch
          %386 = sbr.rel (%p384) target = $region52
        $region51: #{tpu_custom_call.1} parent=47 // pred_region
          %s387 = sand.u32 %s139, 1
          %s388 = scalar_lea.sflag [#allocation4], %s387
          %s389 = sand.u32 %s139, 1
          %s390 = scalar_lea.vmem [#allocation3], %s389
          %392 = dma.done %s388, 16
        $region52: #{tpu_custom_call.1} parent=47 // pred_fallthru
          _
      $region48: #{tpu_custom_call.1} parent=5 // pred_fallthru
        _
    $region6: #{tpu_custom_call.1} parent=1 // loop_footer
      %s19 = sadd.s32 1, %s15
    $region7: #{tpu_custom_call.1} parent=1 // loop_footer_branch
      %14 = sbr.rel target = $region3
    $region8: #{tpu_custom_call.1} parent=1 // loop_exit
      _
    %393 = vsyncpa [#allocation4], 1
    %s394 = scalar_lea.sflag [#allocation4], 1
    %395 = vsyncpa %s394, 1

</llo_original>
